<compile_context>
chip_gen: v7x
topology: tpu7x:2x2x1
jax: 0.10.0
libtpu: 0.0.40
codegen_flags: <defaults>
</compile_context>

<pallas_src>
import jax
import jax.numpy as jnp
from jax.experimental import pallas as pl
from jax.experimental.pallas import tpu as pltpu

BN_EPS = 1e-5
DEFAULT_TILE_B = 512  # review guidance: 512-2048 rows per grid step


def _round_up(x, m):
    return ((x + m - 1) // m) * m


def layered_nn_kernel(x_ref,
                      w0_ref, b0_ref,
                      w1_ref, b1_ref,
                      w2_ref, b2_ref,
                      w3_ref, b3_ref,
                      w4_ref, b4_ref,
                      out_ref):
    # input_layer (BatchNorm already folded into w0/b0 in the wrapper) + ReLU
    h = jnp.dot(x_ref[...], w0_ref[...], preferred_element_type=jnp.float32)
    h = jnp.maximum(h + b0_ref[...], 0.0)

    # layer1 + ReLU  (cast activations to the weight dtype: no-op in f32 mode,
    # bf16 MXU inputs in bf16 mode; accumulation stays f32)
    h = jnp.dot(h.astype(w1_ref.dtype), w1_ref[...], preferred_element_type=jnp.float32)
    h = jnp.maximum(h + b1_ref[...], 0.0)

    # layer2 + ReLU
    h = jnp.dot(h.astype(w2_ref.dtype), w2_ref[...], preferred_element_type=jnp.float32)
    h = jnp.maximum(h + b2_ref[...], 0.0)

    # layer3 + ReLU
    h = jnp.dot(h.astype(w3_ref.dtype), w3_ref[...], preferred_element_type=jnp.float32)
    h = jnp.maximum(h + b3_ref[...], 0.0)

    # Dropout1d(p=0.1) is identity in eval mode (no-op here).

    # output_layer
    out_ref[...] = (jnp.dot(h.astype(w4_ref.dtype), w4_ref[...],
                            preferred_element_type=jnp.float32) + b4_ref[...])


def layered_nn_forward(x, params, *, tile_b=DEFAULT_TILE_B, matmul_dtype=jnp.float32):
    """x: (B, input_size) f32. params: dict of weights (stored (in, out)) + BN stats."""
    batch, in_size = x.shape
    out_size = params["w4"].shape[1]

    # ---- Fold eval-mode BatchNorm into the first Linear (wrapper-side, once) ----
    # BN(x@w0 + b0) = x @ (w0 * s) + ((b0 - mean) * s + beta),  s = gamma / sqrt(var+eps)
    s = params["gamma"] * jax.lax.rsqrt(params["var"] + BN_EPS)          # (1, H)
    w0 = params["w0"] * s                                                # (in, H)
    b0 = (params["b0"] - params["mean"]) * s + params["beta"]            # (1, H)

    weights = [w0.astype(matmul_dtype),
               params["w1"].astype(matmul_dtype),
               params["w2"].astype(matmul_dtype),
               params["w3"].astype(matmul_dtype),
               params["w4"].astype(matmul_dtype)]
    biases = [b0.astype(jnp.float32),
              params["b1"].astype(jnp.float32),
              params["b2"].astype(jnp.float32),
              params["b3"].astype(jnp.float32),
              params["b4"].astype(jnp.float32)]

    # ---- Batch tiling: clamp tile to (sublane-aligned) batch, pad tail rows ----
    tile_b = min(tile_b, _round_up(batch, 8))
    padded_b = _round_up(batch, tile_b)
    x_in = x.astype(matmul_dtype)
    if padded_b != batch:
        x_in = jnp.pad(x_in, ((0, padded_b - batch), (0, 0)))
    grid = (pl.cdiv(padded_b, tile_b),)

    # x / out tiled over the batch; weights & biases resident (constant index map).
    in_specs = [pl.BlockSpec((tile_b, in_size), lambda i: (i, 0))]
    operands = [x_in]
    for w, b in zip(weights, biases):
        in_specs.append(pl.BlockSpec(w.shape, lambda i: (0, 0)))
        in_specs.append(pl.BlockSpec(b.shape, lambda i: (0, 0)))
        operands.append(w)
        operands.append(b)
    out_spec = pl.BlockSpec((tile_b, out_size), lambda i: (i, 0))

    flops = 2 * padded_b * sum(int(w.shape[0]) * int(w.shape[1]) for w in weights)
    bytes_accessed = (int(x_in.size) * x_in.dtype.itemsize
                      + sum(int(w.size) * w.dtype.itemsize for w in weights)
                      + sum(int(b.size) * b.dtype.itemsize for b in biases)
                      + padded_b * out_size * 4)

    out = pl.pallas_call(
        layered_nn_kernel,
        out_shape=jax.ShapeDtypeStruct((padded_b, out_size), jnp.float32),
        grid=grid,
        in_specs=in_specs,
        out_specs=out_spec,
        compiler_params=pltpu.CompilerParams(
            dimension_semantics=("parallel",)),  # v7x: shard batch tiles across 2 TCs
        cost_estimate=pl.CostEstimate(flops=flops, transcendentals=0,
                                      bytes_accessed=bytes_accessed),
    )(*operands)

    return out[:batch]


def init_params(key, input_size, hidden_size=64, output_size=1):
    """Deterministic init mimicking PyTorch nn.Linear default (U[-1/sqrt(fan_in), +])."""
    def linear(k, fan_in, fan_out):
        kw, kb = jax.random.split(k)
        bound = 1.0 / jnp.sqrt(float(fan_in))
        # stored as (in, out) so the kernel computes x @ W
        w = jax.random.uniform(kw, (fan_in, fan_out), jnp.float32, -bound, bound)
        b = jax.random.uniform(kb, (1, fan_out), jnp.float32, -bound, bound)
        return w, b

    ks = jax.random.split(key, 5)
    h = hidden_size
    w0, b0 = linear(ks[0], input_size, h)
    w1, b1 = linear(ks[1], h, h // 2)
    w2, b2 = linear(ks[2], h // 2, h // 4)
    w3, b3 = linear(ks[3], h // 4, h // 8)
    w4, b4 = linear(ks[4], h // 8, output_size)

    return {
        "w0": w0, "b0": b0,
        # BatchNorm1d defaults: gamma=1, beta=0, running_mean=0, running_var=1
        "gamma": jnp.ones((1, h), jnp.float32),
        "beta": jnp.zeros((1, h), jnp.float32),
        "mean": jnp.zeros((1, h), jnp.float32),
        "var": jnp.ones((1, h), jnp.float32),
        "w1": w1, "b1": b1,
        "w2": w2, "b2": b2,
        "w3": w3, "b3": b3,
        "w4": w4, "b4": b4,
    }


def reference_forward(x, p):
    """Pure-JAX f32 reference with the BatchNorm applied un-fused (eval mode)."""
    h = x @ p["w0"] + p["b0"]
    h = (h - p["mean"]) * jax.lax.rsqrt(p["var"] + BN_EPS) * p["gamma"] + p["beta"]
    h = jnp.maximum(h, 0.0)
    h = jnp.maximum(h @ p["w1"] + p["b1"], 0.0)
    h = jnp.maximum(h @ p["w2"] + p["b2"], 0.0)
    h = jnp.maximum(h @ p["w3"] + p["b3"], 0.0)
    return h @ p["w4"] + p["b4"]


if __name__ == "__main__":
    key = jax.random.PRNGKey(0)
    k_x, k_p, k_x2 = jax.random.split(key, 3)

    batch, input_size, hidden_size, output_size = 8, 32, 64, 1
    x = jax.random.normal(k_x, (batch, input_size), jnp.float32)
    params = init_params(k_p, input_size, hidden_size, output_size)
    ref = reference_forward(x, params)

    # f32 matmul path (exact vs. reference)
    out_f32 = jax.block_until_ready(layered_nn_forward(x, params,
                                                       matmul_dtype=jnp.float32))
    assert out_f32.shape == (batch, output_size)
    assert jnp.allclose(out_f32, ref, atol=1e-5, rtol=1e-5)

    # bf16 matmul inputs with f32 accumulation (recommended on v6e/v7x)
    out_bf16 = jax.block_until_ready(layered_nn_forward(x, params,
                                                        matmul_dtype=jnp.bfloat16))
    assert out_bf16.shape == (batch, output_size)
    assert jnp.allclose(out_bf16, ref, atol=5e-2, rtol=5e-2)

    # Odd batch size: exercises the tail-padding path of the batch grid.
    batch2 = 13
    x2 = jax.random.normal(k_x2, (batch2, input_size), jnp.float32)
    ref2 = reference_forward(x2, params)
    out2 = jax.block_until_ready(layered_nn_forward(x2, params,
                                                    matmul_dtype=jnp.float32))
    assert out2.shape == (batch2, output_size)
    assert jnp.allclose(out2, ref2, atol=1e-5, rtol=1e-5)

    print("KERNEL_OK")
</pallas_src>

<mosaic_0001>
module attributes {stable_mosaic.version = 11 : i64} {
  func.func @layered_nn_kernel(%arg0: i32, %arg1: memref<8x32xf32, #tpu.memory_space<vmem>>, %arg2: memref<32x64xf32, #tpu.memory_space<vmem>>, %arg3: memref<1x64xf32, #tpu.memory_space<vmem>>, %arg4: memref<64x32xf32, #tpu.memory_space<vmem>>, %arg5: memref<1x32xf32, #tpu.memory_space<vmem>>, %arg6: memref<32x16xf32, #tpu.memory_space<vmem>>, %arg7: memref<1x16xf32, #tpu.memory_space<vmem>>, %arg8: memref<16x8xf32, #tpu.memory_space<vmem>>, %arg9: memref<1x8xf32, #tpu.memory_space<vmem>>, %arg10: memref<8x1xf32, #tpu.memory_space<vmem>>, %arg11: memref<1x1xf32, #tpu.memory_space<vmem>>, %arg12: memref<8x1xf32, #tpu.memory_space<vmem>>) attributes {dimension_semantics = [#tpu.dimension_semantics<parallel>], iteration_bounds = array<i64: 1>, scalar_prefetch = 0 : i64, scratch_operands = 0 : i64, tpu.core_type = #tpu.core_type<tc>, window_params = [{transform_indices = @transform_0, window_bounds = array<i64: 8, 32>}, {pipeline_mode = #tpu.pipeline_mode<synchronous>, transform_indices = @transform_1, window_bounds = array<i64: 32, 64>}, {pipeline_mode = #tpu.pipeline_mode<synchronous>, transform_indices = @transform_2, window_bounds = array<i64: 1, 64>}, {pipeline_mode = #tpu.pipeline_mode<synchronous>, transform_indices = @transform_3, window_bounds = array<i64: 64, 32>}, {pipeline_mode = #tpu.pipeline_mode<synchronous>, transform_indices = @transform_4, window_bounds = array<i64: 1, 32>}, {pipeline_mode = #tpu.pipeline_mode<synchronous>, transform_indices = @transform_5, window_bounds = array<i64: 32, 16>}, {pipeline_mode = #tpu.pipeline_mode<synchronous>, transform_indices = @transform_6, window_bounds = array<i64: 1, 16>}, {pipeline_mode = #tpu.pipeline_mode<synchronous>, transform_indices = @transform_7, window_bounds = array<i64: 16, 8>}, {pipeline_mode = #tpu.pipeline_mode<synchronous>, transform_indices = @transform_8, window_bounds = array<i64: 1, 8>}, {pipeline_mode = #tpu.pipeline_mode<synchronous>, transform_indices = @transform_9, window_bounds = array<i64: 8, 1>}, {pipeline_mode = #tpu.pipeline_mode<synchronous>, transform_indices = @transform_10, window_bounds = array<i64: 1, 1>}, {transform_indices = @transform_11, window_bounds = array<i64: 8, 1>}]} {
    %c0 = arith.constant 0 : index
    %c0_0 = arith.constant 0 : index
    %0 = vector.load %arg1[%c0, %c0_0] : memref<8x32xf32, #tpu.memory_space<vmem>>, vector<8x32xf32>
    %c0_1 = arith.constant 0 : index
    %c0_2 = arith.constant 0 : index
    %1 = vector.load %arg2[%c0_1, %c0_2] : memref<32x64xf32, #tpu.memory_space<vmem>>, vector<32x64xf32>
    %cst = arith.constant dense<0.000000e+00> : vector<8x64xf32>
    %2 = tpu.matmul %0, %1, %cst {dimension_numbers = #tpu.dot_dimension_numbers<[1], [0], [0], [1], [0, 0, 1, 1], [], []>} : vector<8x32xf32>, vector<32x64xf32>, vector<8x64xf32> -> vector<8x64xf32>
    %c0_3 = arith.constant 0 : index
    %c0_4 = arith.constant 0 : index
    %3 = vector.load %arg3[%c0_3, %c0_4] : memref<1x64xf32, #tpu.memory_space<vmem>>, vector<1x64xf32>
    %4 = vector.broadcast %3 : vector<1x64xf32> to vector<8x64xf32>
    %5 = arith.addf %2, %4 : vector<8x64xf32>
    %cst_5 = arith.constant 0.000000e+00 : f32
    %6 = vector.broadcast %cst_5 : f32 to vector<8x64xf32>
    %7 = arith.maximumf %5, %6 : vector<8x64xf32>
    %c0_6 = arith.constant 0 : index
    %c0_7 = arith.constant 0 : index
    %8 = vector.load %arg4[%c0_6, %c0_7] : memref<64x32xf32, #tpu.memory_space<vmem>>, vector<64x32xf32>
    %cst_8 = arith.constant dense<0.000000e+00> : vector<8x32xf32>
    %9 = tpu.matmul %7, %8, %cst_8 {dimension_numbers = #tpu.dot_dimension_numbers<[1], [0], [0], [1], [0, 0, 1, 1], [], []>} : vector<8x64xf32>, vector<64x32xf32>, vector<8x32xf32> -> vector<8x32xf32>
    %c0_9 = arith.constant 0 : index
    %c0_10 = arith.constant 0 : index
    %10 = vector.load %arg5[%c0_9, %c0_10] : memref<1x32xf32, #tpu.memory_space<vmem>>, vector<1x32xf32>
    %11 = vector.broadcast %10 : vector<1x32xf32> to vector<8x32xf32>
    %12 = arith.addf %9, %11 : vector<8x32xf32>
    %cst_11 = arith.constant 0.000000e+00 : f32
    %13 = vector.broadcast %cst_11 : f32 to vector<8x32xf32>
    %14 = arith.maximumf %12, %13 : vector<8x32xf32>
    %c0_12 = arith.constant 0 : index
    %c0_13 = arith.constant 0 : index
    %15 = vector.load %arg6[%c0_12, %c0_13] : memref<32x16xf32, #tpu.memory_space<vmem>>, vector<32x16xf32>
    %cst_14 = arith.constant dense<0.000000e+00> : vector<8x16xf32>
    %16 = tpu.matmul %14, %15, %cst_14 {dimension_numbers = #tpu.dot_dimension_numbers<[1], [0], [0], [1], [0, 0, 1, 1], [], []>} : vector<8x32xf32>, vector<32x16xf32>, vector<8x16xf32> -> vector<8x16xf32>
    %c0_15 = arith.constant 0 : index
    %c0_16 = arith.constant 0 : index
    %17 = vector.load %arg7[%c0_15, %c0_16] : memref<1x16xf32, #tpu.memory_space<vmem>>, vector<1x16xf32>
    %18 = vector.broadcast %17 : vector<1x16xf32> to vector<8x16xf32>
    %19 = arith.addf %16, %18 : vector<8x16xf32>
    %cst_17 = arith.constant 0.000000e+00 : f32
    %20 = vector.broadcast %cst_17 : f32 to vector<8x16xf32>
    %21 = arith.maximumf %19, %20 : vector<8x16xf32>
    %c0_18 = arith.constant 0 : index
    %c0_19 = arith.constant 0 : index
    %22 = vector.load %arg8[%c0_18, %c0_19] : memref<16x8xf32, #tpu.memory_space<vmem>>, vector<16x8xf32>
    %cst_20 = arith.constant dense<0.000000e+00> : vector<8x8xf32>
    %23 = tpu.matmul %21, %22, %cst_20 {dimension_numbers = #tpu.dot_dimension_numbers<[1], [0], [0], [1], [0, 0, 1, 1], [], []>} : vector<8x16xf32>, vector<16x8xf32>, vector<8x8xf32> -> vector<8x8xf32>
    %c0_21 = arith.constant 0 : index
    %c0_22 = arith.constant 0 : index
    %24 = vector.load %arg9[%c0_21, %c0_22] : memref<1x8xf32, #tpu.memory_space<vmem>>, vector<1x8xf32>
    %25 = vector.broadcast %24 : vector<1x8xf32> to vector<8x8xf32>
    %26 = arith.addf %23, %25 : vector<8x8xf32>
    %cst_23 = arith.constant 0.000000e+00 : f32
    %27 = vector.broadcast %cst_23 : f32 to vector<8x8xf32>
    %28 = arith.maximumf %26, %27 : vector<8x8xf32>
    %c0_24 = arith.constant 0 : index
    %c0_25 = arith.constant 0 : index
    %29 = vector.load %arg10[%c0_24, %c0_25] : memref<8x1xf32, #tpu.memory_space<vmem>>, vector<8x1xf32>
    %cst_26 = arith.constant dense<0.000000e+00> : vector<8x1xf32>
    %30 = tpu.matmul %28, %29, %cst_26 {dimension_numbers = #tpu.dot_dimension_numbers<[1], [0], [0], [1], [0, 0, 1, 1], [], []>} : vector<8x8xf32>, vector<8x1xf32>, vector<8x1xf32> -> vector<8x1xf32>
    %c0_27 = arith.constant 0 : index
    %c0_28 = arith.constant 0 : index
    %31 = vector.load %arg11[%c0_27, %c0_28] : memref<1x1xf32, #tpu.memory_space<vmem>>, vector<1x1xf32>
    %32 = vector.broadcast %31 : vector<1x1xf32> to vector<8x1xf32>
    %33 = arith.addf %30, %32 : vector<8x1xf32>
    %c0_29 = arith.constant 0 : index
    %c0_30 = arith.constant 0 : index
    %34 = vector.load %arg12[%c0_29, %c0_30] : memref<8x1xf32, #tpu.memory_space<vmem>>, vector<8x1xf32>
    tpu.vector_store %arg12[%c0_29, %c0_30], %33 {strides = array<i32>} : memref<8x1xf32, #tpu.memory_space<vmem>>, vector<8x1xf32>,
    return
  }
  func.func @transform_0(%arg0: i32) -> (i32, i32) {
    %c0_i32 = arith.constant 0 : i32
    %c0_i32_0 = arith.constant 0 : i32
    return %arg0, %c0_i32 : i32, i32
  }
  func.func @transform_1(%arg0: i32) -> (i32, i32) {
    %c0_i32 = arith.constant 0 : i32
    %c0_i32_0 = arith.constant 0 : i32
    %c0_i32_1 = arith.constant 0 : i32
    return %c0_i32, %c0_i32_0 : i32, i32
  }
  func.func @transform_2(%arg0: i32) -> (i32, i32) {
    %c0_i32 = arith.constant 0 : i32
    %c0_i32_0 = arith.constant 0 : i32
    %c0_i32_1 = arith.constant 0 : i32
    return %c0_i32, %c0_i32_0 : i32, i32
  }
  func.func @transform_3(%arg0: i32) -> (i32, i32) {
    %c0_i32 = arith.constant 0 : i32
    %c0_i32_0 = arith.constant 0 : i32
    %c0_i32_1 = arith.constant 0 : i32
    return %c0_i32, %c0_i32_0 : i32, i32
  }
  func.func @transform_4(%arg0: i32) -> (i32, i32) {
    %c0_i32 = arith.constant 0 : i32
    %c0_i32_0 = arith.constant 0 : i32
    %c0_i32_1 = arith.constant 0 : i32
    return %c0_i32, %c0_i32_0 : i32, i32
  }
  func.func @transform_5(%arg0: i32) -> (i32, i32) {
    %c0_i32 = arith.constant 0 : i32
    %c0_i32_0 = arith.constant 0 : i32
    %c0_i32_1 = arith.constant 0 : i32
    return %c0_i32, %c0_i32_0 : i32, i32
  }
  func.func @transform_6(%arg0: i32) -> (i32, i32) {
    %c0_i32 = arith.constant 0 : i32
    %c0_i32_0 = arith.constant 0 : i32
    %c0_i32_1 = arith.constant 0 : i32
    return %c0_i32, %c0_i32_0 : i32, i32
  }
  func.func @transform_7(%arg0: i32) -> (i32, i32) {
    %c0_i32 = arith.constant 0 : i32
    %c0_i32_0 = arith.constant 0 : i32
    %c0_i32_1 = arith.constant 0 : i32
    return %c0_i32, %c0_i32_0 : i32, i32
  }
  func.func @transform_8(%arg0: i32) -> (i32, i32) {
    %c0_i32 = arith.constant 0 : i32
    %c0_i32_0 = arith.constant 0 : i32
    %c0_i32_1 = arith.constant 0 : i32
    return %c0_i32, %c0_i32_0 : i32, i32
  }
  func.func @transform_9(%arg0: i32) -> (i32, i32) {
    %c0_i32 = arith.constant 0 : i32
    %c0_i32_0 = arith.constant 0 : i32
    %c0_i32_1 = arith.constant 0 : i32
    return %c0_i32, %c0_i32_0 : i32, i32
  }
  func.func @transform_10(%arg0: i32) -> (i32, i32) {
    %c0_i32 = arith.constant 0 : i32
    %c0_i32_0 = arith.constant 0 : i32
    %c0_i32_1 = arith.constant 0 : i32
    return %c0_i32, %c0_i32_0 : i32, i32
  }
  func.func @transform_11(%arg0: i32) -> (i32, i32) {
    %c0_i32 = arith.constant 0 : i32
    %c0_i32_0 = arith.constant 0 : i32
    return %arg0, %c0_i32 : i32, i32
  }
}

</mosaic_0001>

<llo_original>
// kernel: tpu_custom_call.1
$region0: #{tpu_custom_call.1}
  #allocation0 [shape = 'u32[]', space=smem, size = 0x4, offset = 0x4, fixed_abs, tag = 'smem constant byte address 0x4 - core index']
  #allocation1 [shape = 'u32[144,128]{1,0:T(1,128)}', space=vmem, size = 0x12000, scoped, tag = 'internal scratch']
  #allocation2 [shape = 'f32[1,1]{1,0:T(1,128)S(1)}', space=vmem, size = 0x200, scoped, tag = 'scoped memory for tpu_custom_call.1']
  %s0 = inlined_call_operand.vmem [shape: f32[8,32], index: 0, kind: input, shape index: {}]
  %s1 = inlined_call_operand.vmem [shape: f32[32,64], index: 1, kind: input, shape index: {}]
  %s2 = inlined_call_operand.vmem [shape: f32[1,64], index: 2, kind: input, shape index: {}]
  %s3 = inlined_call_operand.vmem [shape: f32[64,32], index: 3, kind: input, shape index: {}]
  %s4 = inlined_call_operand.vmem [shape: f32[1,32], index: 4, kind: input, shape index: {}]
  %s5 = inlined_call_operand.vmem [shape: f32[32,16], index: 5, kind: input, shape index: {}]
  %s6 = inlined_call_operand.vmem [shape: f32[1,16], index: 6, kind: input, shape index: {}]
  %s7 = inlined_call_operand.vmem [shape: f32[16,8], index: 7, kind: input, shape index: {}]
  %s8 = inlined_call_operand.vmem [shape: f32[1,8], index: 8, kind: input, shape index: {}]
  %s9 = inlined_call_operand.vmem [shape: f32[8,1], index: 9, kind: input, shape index: {}]
  %s10 = inlined_call_operand.<no memory space> [shape: f32[1,1], index: 10, kind: input, shape index: {}]
  %s11 = inlined_call_operand.vmem [shape: f32[8,1], index: 11, kind: output, shape index: {}]
  %s12 = sld [smem:[#allocation0]]
  $region54: #{tpu_custom_call.1} parent=0
    _
  %s14 = ssub.s32 1, %s12
  %s15 = scalar_select 0, %s14, %s12
  %v16 = vstv %s10
  %17 = vst [vmem:[#allocation2] sm:$0x1] %v16
  // Predicated region
  $region2: #{tpu_custom_call.1} parent=0 // pred_check
    _
  $region3: #{tpu_custom_call.1} parent=0 // pred_check_branch
    %19 = sbr.rel (0) target = $region5
  $region4: #{tpu_custom_call.1} parent=0 // pred_region
    _
  $region5: #{tpu_custom_call.1} parent=0 // pred_fallthru
    _
  // Predicated region
  $region6: #{tpu_custom_call.1} parent=0 // pred_check
    _
  $region7: #{tpu_custom_call.1} parent=0 // pred_check_branch
    %21 = sbr.rel (0) target = $region9
  $region8: #{tpu_custom_call.1} parent=0 // pred_region
    _
  $region9: #{tpu_custom_call.1} parent=0 // pred_fallthru
    _
  // Predicated region
  $region10: #{tpu_custom_call.1} parent=0 // pred_check
    _
  $region11: #{tpu_custom_call.1} parent=0 // pred_check_branch
    %23 = sbr.rel (0) target = $region13
  $region12: #{tpu_custom_call.1} parent=0 // pred_region
    _
  $region13: #{tpu_custom_call.1} parent=0 // pred_fallthru
    _
  // Predicated region
  $region14: #{tpu_custom_call.1} parent=0 // pred_check
    _
  $region15: #{tpu_custom_call.1} parent=0 // pred_check_branch
    %25 = sbr.rel (0) target = $region17
  $region16: #{tpu_custom_call.1} parent=0 // pred_region
    _
  $region17: #{tpu_custom_call.1} parent=0 // pred_fallthru
    _
  // Predicated region
  $region18: #{tpu_custom_call.1} parent=0 // pred_check
    _
  $region19: #{tpu_custom_call.1} parent=0 // pred_check_branch
    %27 = sbr.rel (0) target = $region21
  $region20: #{tpu_custom_call.1} parent=0 // pred_region
    _
  $region21: #{tpu_custom_call.1} parent=0 // pred_fallthru
    _
  // Predicated region
  $region22: #{tpu_custom_call.1} parent=0 // pred_check
    _
  $region23: #{tpu_custom_call.1} parent=0 // pred_check_branch
    %29 = sbr.rel (0) target = $region25
  $region24: #{tpu_custom_call.1} parent=0 // pred_region
    _
  $region25: #{tpu_custom_call.1} parent=0 // pred_fallthru
    _
  // Predicated region
  $region26: #{tpu_custom_call.1} parent=0 // pred_check
    _
  $region27: #{tpu_custom_call.1} parent=0 // pred_check_branch
    %31 = sbr.rel (0) target = $region29
  $region28: #{tpu_custom_call.1} parent=0 // pred_region
    _
  $region29: #{tpu_custom_call.1} parent=0 // pred_fallthru
    _
  // Predicated region
  $region30: #{tpu_custom_call.1} parent=0 // pred_check
    _
  $region31: #{tpu_custom_call.1} parent=0 // pred_check_branch
    %33 = sbr.rel (0) target = $region33
  $region32: #{tpu_custom_call.1} parent=0 // pred_region
    _
  $region33: #{tpu_custom_call.1} parent=0 // pred_fallthru
    _
  // Predicated region
  $region34: #{tpu_custom_call.1} parent=0 // pred_check
    _
  $region35: #{tpu_custom_call.1} parent=0 // pred_check_branch
    %35 = sbr.rel (0) target = $region37
  $region36: #{tpu_custom_call.1} parent=0 // pred_region
    _
  $region37: #{tpu_custom_call.1} parent=0 // pred_fallthru
    _
  // Predicated region
  $region38: #{tpu_custom_call.1} parent=0 // pred_check
    _
  $region39: #{tpu_custom_call.1} parent=0 // pred_check_branch
    %37 = sbr.rel (0) target = $region41
  $region40: #{tpu_custom_call.1} parent=0 // pred_region
    _
  $region41: #{tpu_custom_call.1} parent=0 // pred_fallthru
    _
  // Predicated region
  $region42: #{tpu_custom_call.1} parent=0 // pred_check
    _
  $region43: #{tpu_custom_call.1} parent=0 // pred_check_branch
    %39 = sbr.rel (0) target = $region45
  $region44: #{tpu_custom_call.1} parent=0 // pred_region
    _
  $region45: #{tpu_custom_call.1} parent=0 // pred_fallthru
    _
  %v40 = vld [vmem:[%s0] sm:$0xff]
  %v41 = vld [vmem:[%s1] sm:$0xff]
  %v42 = vld [vmem:[%s1 + $0x8] sm:$0xff]
  %v43 = vld [vmem:[%s1 + $0x10] sm:$0xff]
  %v44 = vld [vmem:[%s1 + $0x18] sm:$0xff]
  %v45 = vld [vmem:[%s2] sm:$0x1]
  %v47 = vlaneseq
  %v48 = vshrl.u32 %v47, 7
  %v49 = vsub.s32 0, %v48
  %v50 = vrot.slane %v45, %v49
  %vm52 = vcmask 261120
  %v54 = vsel %vm52, %v40, 0
  %56 = vmatprep.subr.mxu0 0.0
  %57 = vmatpush1.msra.mxu0 %v41
  %58 = vmatprep.subr.mxu0 0.0
  %59 = vmatpush1.msra.mxu0 %v42
  %60 = vmatprep.subr.mxu0 0.0
  %61 = vmatpush1.msra.mxu0 %v43
  %62 = vmatprep.subr.mxu0 0.0
  %63 = vmatpush1.msra.mxu0 %v44
  %64 = vmatprep.subr.mxu0 0.0
  %65 = vmatpush1.msra.mxu0 0.0
  %66 = vmatprep.subr.mxu0 0.0
  %67 = vmatpush1.msra.mxu0 0.0
  %68 = vmatprep.subr.mxu0 0.0
  %69 = vmatpush1.msra.mxu0 0.0
  %70 = vmatprep.subr.mxu0 0.0
  %71 = vmatpush1.msra.mxu0 0.0
  %72 = vmatprep.subr.mxu0 0.0
  %73 = vmatpush1.msra.mxu0 0.0
  %74 = vmatprep.subr.mxu0 0.0
  %75 = vmatpush1.msra.mxu0 0.0
  %76 = vmatprep.subr.mxu0 0.0
  %77 = vmatpush1.msra.mxu0 0.0
  %78 = vmatprep.subr.mxu0 0.0
  %79 = vmatpush1.msra.mxu0 0.0
  %80 = vmatprep.subr.mxu0 0.0
  %81 = vmatpush1.msra.mxu0 0.0
  %82 = vmatprep.subr.mxu0 0.0
  %83 = vmatpush1.msra.mxu0 0.0
  %84 = vmatprep.subr.mxu0 0.0
  %85 = vmatpush1.msra.mxu0 0.0
  %86 = vmatprep.subr.mxu0 0.0
  %87 = vmatpush1.msra.mxu0 0.0
  %88 = vmatprep.subr.mxu0 0.0
  %89 = vmatpush1.msra.mxu0 0.0
  %90 = vmatprep.subr.mxu0 0.0
  %91 = vmatpush1.msra.mxu0 0.0
  %92 = vmatprep.subr.mxu0 0.0
  %93 = vmatpush1.msra.mxu0 0.0
  %94 = vmatprep.subr.mxu0 0.0
  %95 = vmatpush1.msra.mxu0 0.0
  %96 = vmatprep.subr.mxu0 0.0
  %97 = vmatpush1.msra.mxu0 0.0
  %98 = vmatprep.subr.mxu0 0.0
  %99 = vmatpush1.msra.mxu0 0.0
  %100 = vmatprep.subr.mxu0 0.0
  %101 = vmatpush1.msra.mxu0 0.0
  %102 = vmatprep.subr.mxu0 0.0
  %103 = vmatpush1.msra.mxu0 0.0
  %104 = vmatprep.subr.mxu0 0.0
  %105 = vmatpush1.msra.mxu0 0.0
  %106 = vmatprep.subr.mxu0 0.0
  %107 = vmatpush1.msra.mxu0 0.0
  %108 = vmatprep.subr.mxu0 0.0
  %109 = vmatpush1.msra.mxu0 0.0
  %110 = vmatprep.subr.mxu0 0.0
  %111 = vmatpush1.msra.mxu0 0.0
  %112 = vmatprep.subr.mxu0 0.0
  %113 = vmatpush1.msra.mxu0 0.0
  %114 = vmatprep.subr.mxu0 0.0
  %115 = vmatpush1.msra.mxu0 0.0
  %116 = vmatprep.subr.mxu0 0.0
  %117 = vmatpush1.msra.mxu0 0.0
  %118 = vmatprep.subr.mxu0 0.0
  %119 = vmatpush1.msra.mxu0 0.0
  %120 = vmatprep.mubr.f32.mxu0 0.0
  %121 = vmatmul.mubr.f32.gmra.mrb[0].mxu0 %v54
  %v122 = vpop.f32.mrb[0].mxu0
  %v123 = vadd.f32 %v50, %v122
  %v124 = vpop.f32.mrb[0].mxu0
  %125 = vdwg.mxu0
  %v126 = vmax.f32 %v123, 0.0
  %v127 = vld [vmem:[%s3] sm:$0xff]
  %v128 = vld [vmem:[%s3 + $0x8] sm:$0xff]
  %v129 = vld [vmem:[%s3 + $0x10] sm:$0xff]
  %v130 = vld [vmem:[%s3 + $0x18] sm:$0xff]
  %v131 = vld [vmem:[%s3 + $0x20] sm:$0xff]
  %v132 = vld [vmem:[%s3 + $0x28] sm:$0xff]
  %v133 = vld [vmem:[%s3 + $0x30] sm:$0xff]
  %v134 = vld [vmem:[%s3 + $0x38] sm:$0xff]
  %v135 = vld [vmem:[%s4] sm:$0x1]
  %v137 = vlaneseq
  %v138 = vshrl.u32 %v137, 7
  %v139 = vsub.s32 0, %v138
  %v140 = vrot.slane %v135, %v139
  %vm142 = vcmask 523264
  %v144 = vsel %vm142, %v126, 0
  %146 = vmatprep.subr.mxu0 0.0
  %147 = vmatpush1.msra.mxu0 %v127
  %148 = vmatprep.subr.mxu0 0.0
  %149 = vmatpush1.msra.mxu0 %v128
  %150 = vmatprep.subr.mxu0 0.0
  %151 = vmatpush1.msra.mxu0 %v129
  %152 = vmatprep.subr.mxu0 0.0
  %153 = vmatpush1.msra.mxu0 %v130
  %154 = vmatprep.subr.mxu0 0.0
  %155 = vmatpush1.msra.mxu0 %v131
  %156 = vmatprep.subr.mxu0 0.0
  %157 = vmatpush1.msra.mxu0 %v132
  %158 = vmatprep.subr.mxu0 0.0
  %159 = vmatpush1.msra.mxu0 %v133
  %160 = vmatprep.subr.mxu0 0.0
  %161 = vmatpush1.msra.mxu0 %v134
  %162 = vmatprep.subr.mxu0 0.0
  %163 = vmatpush1.msra.mxu0 0.0
  %164 = vmatprep.subr.mxu0 0.0
  %165 = vmatpush1.msra.mxu0 0.0
  %166 = vmatprep.subr.mxu0 0.0
  %167 = vmatpush1.msra.mxu0 0.0
  %168 = vmatprep.subr.mxu0 0.0
  %169 = vmatpush1.msra.mxu0 0.0
  %170 = vmatprep.subr.mxu0 0.0
  %171 = vmatpush1.msra.mxu0 0.0
  %172 = vmatprep.subr.mxu0 0.0
  %173 = vmatpush1.msra.mxu0 0.0
  %174 = vmatprep.subr.mxu0 0.0
  %175 = vmatpush1.msra.mxu0 0.0
  %176 = vmatprep.subr.mxu0 0.0
  %177 = vmatpush1.msra.mxu0 0.0
  %178 = vmatprep.subr.mxu0 0.0
  %179 = vmatpush1.msra.mxu0 0.0
  %180 = vmatprep.subr.mxu0 0.0
  %181 = vmatpush1.msra.mxu0 0.0
  %182 = vmatprep.subr.mxu0 0.0
  %183 = vmatpush1.msra.mxu0 0.0
  %184 = vmatprep.subr.mxu0 0.0
  %185 = vmatpush1.msra.mxu0 0.0
  %186 = vmatprep.subr.mxu0 0.0
  %187 = vmatpush1.msra.mxu0 0.0
  %188 = vmatprep.subr.mxu0 0.0
  %189 = vmatpush1.msra.mxu0 0.0
  %190 = vmatprep.subr.mxu0 0.0
  %191 = vmatpush1.msra.mxu0 0.0
  %192 = vmatprep.subr.mxu0 0.0
  %193 = vmatpush1.msra.mxu0 0.0
  %194 = vmatprep.subr.mxu0 0.0
  %195 = vmatpush1.msra.mxu0 0.0
  %196 = vmatprep.subr.mxu0 0.0
  %197 = vmatpush1.msra.mxu0 0.0
  %198 = vmatprep.subr.mxu0 0.0
  %199 = vmatpush1.msra.mxu0 0.0
  %200 = vmatprep.subr.mxu0 0.0
  %201 = vmatpush1.msra.mxu0 0.0
  %202 = vmatprep.subr.mxu0 0.0
  %203 = vmatpush1.msra.mxu0 0.0
  %204 = vmatprep.subr.mxu0 0.0
  %205 = vmatpush1.msra.mxu0 0.0
  %206 = vmatprep.subr.mxu0 0.0
  %207 = vmatpush1.msra.mxu0 0.0
  %208 = vmatprep.subr.mxu0 0.0
  %209 = vmatpush1.msra.mxu0 0.0
  %210 = vmatprep.mubr.f32.mxu0 0.0
  %211 = vmatmul.mubr.f32.gmra.mrb[0].mxu0 %v144
  %v212 = vpop.f32.mrb[0].mxu0
  %v213 = vadd.f32 %v140, %v212
  %v214 = vpop.f32.mrb[0].mxu0
  %215 = vdwg.mxu0
  %v216 = vmax.f32 %v213, 0.0
  %v217 = vld [vmem:[%s5] sm:$0xff]
  %v218 = vld [vmem:[%s5 + $0x8] sm:$0xff]
  %v219 = vld [vmem:[%s5 + $0x10] sm:$0xff]
  %v220 = vld [vmem:[%s5 + $0x18] sm:$0xff]
  %v221 = vld [vmem:[%s6] sm:$0x1]
  %v223 = vlaneseq
  %v224 = vshrl.u32 %v223, 7
  %v225 = vsub.s32 0, %v224
  %v226 = vrot.slane %v221, %v225
  %v229 = vsel %vm52, %v216, 0
  %231 = vmatprep.subr.mxu0 0.0
  %232 = vmatpush1.msra.mxu0 %v217
  %233 = vmatprep.subr.mxu0 0.0
  %234 = vmatpush1.msra.mxu0 %v218
  %235 = vmatprep.subr.mxu0 0.0
  %236 = vmatpush1.msra.mxu0 %v219
  %237 = vmatprep.subr.mxu0 0.0
  %238 = vmatpush1.msra.mxu0 %v220
  %239 = vmatprep.subr.mxu0 0.0
  %240 = vmatpush1.msra.mxu0 0.0
  %241 = vmatprep.subr.mxu0 0.0
  %242 = vmatpush1.msra.mxu0 0.0
  %243 = vmatprep.subr.mxu0 0.0
  %244 = vmatpush1.msra.mxu0 0.0
  %245 = vmatprep.subr.mxu0 0.0
  %246 = vmatpush1.msra.mxu0 0.0
  %247 = vmatprep.subr.mxu0 0.0
  %248 = vmatpush1.msra.mxu0 0.0
  %249 = vmatprep.subr.mxu0 0.0
  %250 = vmatpush1.msra.mxu0 0.0
  %251 = vmatprep.subr.mxu0 0.0
  %252 = vmatpush1.msra.mxu0 0.0
  %253 = vmatprep.subr.mxu0 0.0
  %254 = vmatpush1.msra.mxu0 0.0
  %255 = vmatprep.subr.mxu0 0.0
  %256 = vmatpush1.msra.mxu0 0.0
  %257 = vmatprep.subr.mxu0 0.0
  %258 = vmatpush1.msra.mxu0 0.0
  %259 = vmatprep.subr.mxu0 0.0
  %260 = vmatpush1.msra.mxu0 0.0
  %261 = vmatprep.subr.mxu0 0.0
  %262 = vmatpush1.msra.mxu0 0.0
  %263 = vmatprep.subr.mxu0 0.0
  %264 = vmatpush1.msra.mxu0 0.0
  %265 = vmatprep.subr.mxu0 0.0
  %266 = vmatpush1.msra.mxu0 0.0
  %267 = vmatprep.subr.mxu0 0.0
  %268 = vmatpush1.msra.mxu0 0.0
  %269 = vmatprep.subr.mxu0 0.0
  %270 = vmatpush1.msra.mxu0 0.0
  %271 = vmatprep.subr.mxu0 0.0
  %272 = vmatpush1.msra.mxu0 0.0
  %273 = vmatprep.subr.mxu0 0.0
  %274 = vmatpush1.msra.mxu0 0.0
  %275 = vmatprep.subr.mxu0 0.0
  %276 = vmatpush1.msra.mxu0 0.0
  %277 = vmatprep.subr.mxu0 0.0
  %278 = vmatpush1.msra.mxu0 0.0
  %279 = vmatprep.subr.mxu0 0.0
  %280 = vmatpush1.msra.mxu0 0.0
  %281 = vmatprep.subr.mxu0 0.0
  %282 = vmatpush1.msra.mxu0 0.0
  %283 = vmatprep.subr.mxu0 0.0
  %284 = vmatpush1.msra.mxu0 0.0
  %285 = vmatprep.subr.mxu0 0.0
  %286 = vmatpush1.msra.mxu0 0.0
  %287 = vmatprep.subr.mxu0 0.0
  %288 = vmatpush1.msra.mxu0 0.0
  %289 = vmatprep.subr.mxu0 0.0
  %290 = vmatpush1.msra.mxu0 0.0
  %291 = vmatprep.subr.mxu0 0.0
  %292 = vmatpush1.msra.mxu0 0.0
  %293 = vmatprep.subr.mxu0 0.0
  %294 = vmatpush1.msra.mxu0 0.0
  %295 = vmatprep.mubr.f32.mxu0 0.0
  %296 = vmatmul.mubr.f32.gmra.mrb[0].mxu0 %v229
  %v297 = vpop.f32.mrb[0].mxu0
  %v298 = vadd.f32 %v226, %v297
  %v299 = vpop.f32.mrb[0].mxu0
  %300 = vdwg.mxu0
  %v301 = vmax.f32 %v298, 0.0
  %v302 = vld [vmem:[%s7] sm:$0xff]
  %v303 = vld [vmem:[%s7 + $0x8] sm:$0xff]
  %v304 = vld [vmem:[%s8] sm:$0x1]
  %v306 = vlaneseq
  %v307 = vshrl.u32 %v306, 7
  %v308 = vsub.s32 0, %v307
  %v309 = vrot.slane %v304, %v308
  %vm311 = vcmask 130048
  %v313 = vsel %vm311, %v301, 0
  %315 = vmatprep.subr.mxu0 0.0
  %316 = vmatpush1.msra.mxu0 %v302
  %317 = vmatprep.subr.mxu0 0.0
  %318 = vmatpush1.msra.mxu0 %v303
  %319 = vmatprep.subr.mxu0 0.0
  %320 = vmatpush1.msra.mxu0 0.0
  %321 = vmatprep.subr.mxu0 0.0
  %322 = vmatpush1.msra.mxu0 0.0
  %323 = vmatprep.subr.mxu0 0.0
  %324 = vmatpush1.msra.mxu0 0.0
  %325 = vmatprep.subr.mxu0 0.0
  %326 = vmatpush1.msra.mxu0 0.0
  %327 = vmatprep.subr.mxu0 0.0
  %328 = vmatpush1.msra.mxu0 0.0
  %329 = vmatprep.subr.mxu0 0.0
  %330 = vmatpush1.msra.mxu0 0.0
  %331 = vmatprep.subr.mxu0 0.0
  %332 = vmatpush1.msra.mxu0 0.0
  %333 = vmatprep.subr.mxu0 0.0
  %334 = vmatpush1.msra.mxu0 0.0
  %335 = vmatprep.subr.mxu0 0.0
  %336 = vmatpush1.msra.mxu0 0.0
  %337 = vmatprep.subr.mxu0 0.0
  %338 = vmatpush1.msra.mxu0 0.0
  %339 = vmatprep.subr.mxu0 0.0
  %340 = vmatpush1.msra.mxu0 0.0
  %341 = vmatprep.subr.mxu0 0.0
  %342 = vmatpush1.msra.mxu0 0.0
  %343 = vmatprep.subr.mxu0 0.0
  %344 = vmatpush1.msra.mxu0 0.0
  %345 = vmatprep.subr.mxu0 0.0
  %346 = vmatpush1.msra.mxu0 0.0
  %347 = vmatprep.subr.mxu0 0.0
  %348 = vmatpush1.msra.mxu0 0.0
  %349 = vmatprep.subr.mxu0 0.0
  %350 = vmatpush1.msra.mxu0 0.0
  %351 = vmatprep.subr.mxu0 0.0
  %352 = vmatpush1.msra.mxu0 0.0
  %353 = vmatprep.subr.mxu0 0.0
  %354 = vmatpush1.msra.mxu0 0.0
  %355 = vmatprep.subr.mxu0 0.0
  %356 = vmatpush1.msra.mxu0 0.0
  %357 = vmatprep.subr.mxu0 0.0
  %358 = vmatpush1.msra.mxu0 0.0
  %359 = vmatprep.subr.mxu0 0.0
  %360 = vmatpush1.msra.mxu0 0.0
  %361 = vmatprep.subr.mxu0 0.0
  %362 = vmatpush1.msra.mxu0 0.0
  %363 = vmatprep.subr.mxu0 0.0
  %364 = vmatpush1.msra.mxu0 0.0
  %365 = vmatprep.subr.mxu0 0.0
  %366 = vmatpush1.msra.mxu0 0.0
  %367 = vmatprep.subr.mxu0 0.0
  %368 = vmatpush1.msra.mxu0 0.0
  %369 = vmatprep.subr.mxu0 0.0
  %370 = vmatpush1.msra.mxu0 0.0
  %371 = vmatprep.subr.mxu0 0.0
  %372 = vmatpush1.msra.mxu0 0.0
  %373 = vmatprep.subr.mxu0 0.0
  %374 = vmatpush1.msra.mxu0 0.0
  %375 = vmatprep.subr.mxu0 0.0
  %376 = vmatpush1.msra.mxu0 0.0
  %377 = vmatprep.subr.mxu0 0.0
  %378 = vmatpush1.msra.mxu0 0.0
  %379 = vmatprep.mubr.f32.mxu0 0.0
  %380 = vmatmul.mubr.f32.gmra.mrb[0].mxu0 %v313
  %v381 = vpop.f32.mrb[0].mxu0
  %v382 = vadd.f32 %v309, %v381
  %v383 = vpop.f32.mrb[0].mxu0
  %384 = vdwg.mxu0
  %v385 = vmax.f32 %v382, 0.0
  %v386 = vld [vmem:[%s9] sm:$0xff]
  %v387 = vld [vmem:[#allocation2] sm:$0x1]
  %v389 = vlaneseq
  %v390 = vshrl.u32 %v389, 7
  %v391 = vsub.s32 0, %v390
  %v392 = vrot.slane %v387, %v391
  %vm394 = vcmask 64512
  %v396 = vsel %vm394, %v385, 0
  %398 = vmatprep.subr.mxu0 0.0
  %399 = vmatpush1.msra.mxu0 %v386
  %400 = vmatprep.subr.mxu0 0.0
  %401 = vmatpush1.msra.mxu0 0.0
  %402 = vmatprep.subr.mxu0 0.0
  %403 = vmatpush1.msra.mxu0 0.0
  %404 = vmatprep.subr.mxu0 0.0
  %405 = vmatpush1.msra.mxu0 0.0
  %406 = vmatprep.subr.mxu0 0.0
  %407 = vmatpush1.msra.mxu0 0.0
  %408 = vmatprep.subr.mxu0 0.0
  %409 = vmatpush1.msra.mxu0 0.0
  %410 = vmatprep.subr.mxu0 0.0
  %411 = vmatpush1.msra.mxu0 0.0
  %412 = vmatprep.subr.mxu0 0.0
  %413 = vmatpush1.msra.mxu0 0.0
  %414 = vmatprep.subr.mxu0 0.0
  %415 = vmatpush1.msra.mxu0 0.0
  %416 = vmatprep.subr.mxu0 0.0
  %417 = vmatpush1.msra.mxu0 0.0
  %418 = vmatprep.subr.mxu0 0.0
  %419 = vmatpush1.msra.mxu0 0.0
  %420 = vmatprep.subr.mxu0 0.0
  %421 = vmatpush1.msra.mxu0 0.0
  %422 = vmatprep.subr.mxu0 0.0
  %423 = vmatpush1.msra.mxu0 0.0
  %424 = vmatprep.subr.mxu0 0.0
  %425 = vmatpush1.msra.mxu0 0.0
  %426 = vmatprep.subr.mxu0 0.0
  %427 = vmatpush1.msra.mxu0 0.0
  %428 = vmatprep.subr.mxu0 0.0
  %429 = vmatpush1.msra.mxu0 0.0
  %430 = vmatprep.subr.mxu0 0.0
  %431 = vmatpush1.msra.mxu0 0.0
  %432 = vmatprep.subr.mxu0 0.0
  %433 = vmatpush1.msra.mxu0 0.0
  %434 = vmatprep.subr.mxu0 0.0
  %435 = vmatpush1.msra.mxu0 0.0
  %436 = vmatprep.subr.mxu0 0.0
  %437 = vmatpush1.msra.mxu0 0.0
  %438 = vmatprep.subr.mxu0 0.0
  %439 = vmatpush1.msra.mxu0 0.0
  %440 = vmatprep.subr.mxu0 0.0
  %441 = vmatpush1.msra.mxu0 0.0
  %442 = vmatprep.subr.mxu0 0.0
  %443 = vmatpush1.msra.mxu0 0.0
  %444 = vmatprep.subr.mxu0 0.0
  %445 = vmatpush1.msra.mxu0 0.0
  %446 = vmatprep.subr.mxu0 0.0
  %447 = vmatpush1.msra.mxu0 0.0
  %448 = vmatprep.subr.mxu0 0.0
  %449 = vmatpush1.msra.mxu0 0.0
  %450 = vmatprep.subr.mxu0 0.0
  %451 = vmatpush1.msra.mxu0 0.0
  %452 = vmatprep.subr.mxu0 0.0
  %453 = vmatpush1.msra.mxu0 0.0
  %454 = vmatprep.subr.mxu0 0.0
  %455 = vmatpush1.msra.mxu0 0.0
  %456 = vmatprep.subr.mxu0 0.0
  %457 = vmatpush1.msra.mxu0 0.0
  %458 = vmatprep.subr.mxu0 0.0
  %459 = vmatpush1.msra.mxu0 0.0
  %460 = vmatprep.subr.mxu0 0.0
  %461 = vmatpush1.msra.mxu0 0.0
  %462 = vmatprep.mubr.f32.mxu0 0.0
  %463 = vmatmul.mubr.f32.gmra.mrb[0].mxu0 %v396
  %v464 = vpop.f32.mrb[0].mxu0
  %v465 = vadd.f32 %v392, %v464
  %v466 = vpop.f32.mrb[0].mxu0
  %467 = vdwg.mxu0
  %vm468 = vcmask 7168
  %469 = vst.msk [vmem:[%s11] sm:$0xff] %vm468, %v465
  // Predicated region
  $region46: #{tpu_custom_call.1} parent=0 // pred_check
    _
  $region47: #{tpu_custom_call.1} parent=0 // pred_check_branch
    %471 = sbr.rel (0) target = $region49
  $region48: #{tpu_custom_call.1} parent=0 // pred_region
    _
  $region49: #{tpu_custom_call.1} parent=0 // pred_fallthru
    _
  // Predicated region
  $region50: #{tpu_custom_call.1} parent=0 // pred_check
    _
  $region51: #{tpu_custom_call.1} parent=0 // pred_check_branch
    %473 = sbr.rel (0) target = $region53
  $region52: #{tpu_custom_call.1} parent=0 // pred_region
    _
  $region53: #{tpu_custom_call.1} parent=0 // pred_fallthru
    _

</llo_original>
